<compile_context>
chip_gen: v5e
topology: v5e:2x2
jax: 0.10.0
libtpu: 0.0.40
codegen_flags: <defaults>
</compile_context>

<pallas_src>
import copy
import math

import numpy as np
import jax
import jax.numpy as jnp
from jax import lax
from jax.experimental import pallas as pl
from jax.experimental.pallas import tpu as pltpu


# ---------------------------------------------------------------------------
# Cell-anchor generation (host-side, mirrors generate_cell_anchors)
# ---------------------------------------------------------------------------
def generate_cell_anchors(sizes=(32, 64, 128, 256, 512),
                          aspect_ratios=(0.5, 1, 2)):
    anchors = []
    for size in sizes:
        area = float(size) ** 2.0
        for aspect_ratio in aspect_ratios:
            w = math.sqrt(area / aspect_ratio)
            h = aspect_ratio * w
            anchors.append([-w / 2.0, -h / 2.0, w / 2.0, h / 2.0])
    return np.asarray(anchors, dtype=np.float32)  # (A, 4), XYXY


def _round_up(x, m):
    return ((x + m - 1) // m) * m


# ---------------------------------------------------------------------------
# Pallas kernel: one grid step == one (TH, lanes_pad) row-tile of one level
#   out[h, k] = x_row[k] + h * y_stride_row[k]
# where k = x*A*4 + a*4 + c,
#   x_row[k]        = base[a, c] + offset*stride + (c even ? x*stride : 0)
#   y_stride_row[k] = (c odd ? stride : 0)
# ---------------------------------------------------------------------------
def _anchor_kernel(xrow_ref, ysr_ref, out_ref):
    th = out_ref.shape[0]
    h0 = pl.program_id(0) * th
    h = (h0 + lax.broadcasted_iota(jnp.int32, out_ref.shape, 0)
         ).astype(jnp.float32)
    out_ref[...] = xrow_ref[...] + h * ysr_ref[...]


def _grid_anchors_one_level(base, H, W, stride, offset):
    """Produce the lane-dense (h_out, lanes_pad) slab for one feature level.

    Returns (slab, wa4) where slab[:H, :wa4] holds the anchors in PyTorch's
    flat element order; wa4 = W * A * 4.
    """
    base = np.asarray(base, dtype=np.float32)
    A = base.shape[0]
    wa4 = W * A * 4
    lanes_pad = _round_up(wa4, 128)
    h_pad = _round_up(H, 8)

    # Row-tile size: keep the double-buffered output block small (<= ~8 MiB
    # total), cap at 512 rows, keep it a multiple of 8.
    bytes_per_row = lanes_pad * 4
    max_rows_by_vmem = max(8, (int((4 << 20) // bytes_per_row) // 8) * 8)
    th = min(h_pad, 512, max_rows_by_vmem)
    n_tiles = -(-h_pad // th)
    h_out = n_tiles * th

    # Host precompute of the two (1, lanes_pad) row constants.
    start = float(offset) * float(stride)
    base_flat = np.tile(base.reshape(-1), W)                       # (wa4,)
    shift_x = np.repeat(np.arange(W, dtype=np.float32) * stride, A * 4)
    is_y = np.tile(np.array([0.0, 1.0, 0.0, 1.0], np.float32), W * A)
    x_row = np.zeros((1, lanes_pad), np.float32)
    ys_row = np.zeros((1, lanes_pad), np.float32)
    x_row[0, :wa4] = base_flat + start + shift_x * (1.0 - is_y)
    ys_row[0, :wa4] = is_y * float(stride)

    slab = pl.pallas_call(
        _anchor_kernel,
        out_shape=jax.ShapeDtypeStruct((h_out, lanes_pad), jnp.float32),
        grid=(n_tiles,),
        in_specs=[
            pl.BlockSpec((1, lanes_pad), lambda i: (0, 0)),
            pl.BlockSpec((1, lanes_pad), lambda i: (0, 0)),
        ],
        out_specs=pl.BlockSpec((th, lanes_pad), lambda i: (i, 0)),
        compiler_params=pltpu.CompilerParams(
            dimension_semantics=("parallel",),
            vmem_limit_bytes=32 << 20),
    )(jnp.asarray(x_row), jnp.asarray(ys_row))
    return slab, wa4


# ---------------------------------------------------------------------------
# Module-equivalent wrapper
# ---------------------------------------------------------------------------
class YOLOFAnchorGeneratorPallas:
    box_dim = 4

    def __init__(self, sizes, aspect_ratios, strides, offset):
        self.strides = strides
        self.offset = offset
        assert 0.0 <= self.offset < 1.0, self.offset
        self.num_features = len(strides)
        assert self.num_features == len(sizes)
        assert self.num_features == len(aspect_ratios)
        # deterministic, in-script buffers (equivalent of BufferList)
        self.cell_anchors = [generate_cell_anchors(s, a)
                             for s, a in zip(sizes, aspect_ratios)]
        # anchors are static per input resolution -> memoize
        self._slab_cache = {}
        self._anchor_cache = {}

    @property
    def num_cell_anchors(self):
        return [int(ca.shape[0]) for ca in self.cell_anchors]

    def grid_anchors_slabs(self, grid_sizes):
        """Lane-dense anchors: list of ((h_out, lanes_pad) slab, H, wa4).

        slab[:H, :wa4] holds the anchors of that level in PyTorch's flat
        element order; consumers that can use this layout avoid the (N, 4)
        relayout entirely.
        """
        key = tuple((int(H), int(W)) for H, W in grid_sizes)
        if key not in self._slab_cache:
            slabs = []
            for (H, W), stride, base in zip(key, self.strides,
                                            self.cell_anchors):
                slab, wa4 = _grid_anchors_one_level(base, H, W, stride,
                                                    self.offset)
                slabs.append((slab, H, wa4))
            self._slab_cache[key] = slabs
        return self._slab_cache[key]

    def grid_anchors(self, grid_sizes):
        """PyTorch-compatible: list of (H*W*A, 4) float32 arrays."""
        key = tuple((int(H), int(W)) for H, W in grid_sizes)
        if key not in self._anchor_cache:
            anchors = []
            for slab, H, wa4 in self.grid_anchors_slabs(key):
                # Relayout only at the external API boundary.
                anchors.append(slab[:H, :wa4].reshape(H * wa4 // 4, 4))
            self._anchor_cache[key] = anchors
        return self._anchor_cache[key]

    def __call__(self, features):
        # features: list of NCHW arrays (only H, W are used)
        num_images = features[0].shape[0]
        grid_sizes = [f.shape[-2:] for f in features]
        anchors_over_all_feature_maps = self.grid_anchors(grid_sizes)
        # TODO(synk): detectron2 `Boxes` wrapper has no Pallas/JAX equivalent;
        # we return the raw (H*W*A, 4) anchor arrays instead.
        anchors_in_image = list(anchors_over_all_feature_maps)
        return [copy.copy(anchors_in_image) for _ in range(num_images)]


# ---------------------------------------------------------------------------
# Pure-JAX reference (mirrors the PyTorch math) for verification
# ---------------------------------------------------------------------------
def _ref_grid_anchors(base, H, W, stride, offset):
    base = jnp.asarray(base, dtype=jnp.float32)
    start = offset * stride
    xs = jnp.arange(start, W * stride + start, stride, dtype=jnp.float32)
    ys = jnp.arange(start, H * stride + start, stride, dtype=jnp.float32)
    sy, sx = jnp.meshgrid(ys, xs, indexing="ij")
    sx = sx.reshape(-1)
    sy = sy.reshape(-1)
    shifts = jnp.stack([sx, sy, sx, sy], axis=1)
    return (shifts[:, None, :] + base[None, :, :]).reshape(-1, 4)


if __name__ == "__main__":
    key = jax.random.PRNGKey(0)
    k1, k2 = jax.random.split(key)

    # two feature levels, NCHW, small shapes
    feat0 = jax.random.normal(k1, (2, 4, 16, 16), dtype=jnp.float32)
    feat1 = jax.random.normal(k2, (2, 4, 8, 8), dtype=jnp.float32)
    features = [feat0, feat1]

    sizes = [[32, 64], [64, 128]]
    aspect_ratios = [[0.5, 1.0, 2.0], [0.5, 1.0, 2.0]]
    strides = [16, 32]
    offset = 0.5

    gen = YOLOFAnchorGeneratorPallas(sizes, aspect_ratios, strides, offset)
    anchors = gen(features)
    anchors = jax.block_until_ready(anchors)

    # checks: list-of-lists structure, shapes, numerics vs reference
    assert len(anchors) == features[0].shape[0]           # num_images
    assert len(anchors[0]) == len(features)               # num feature levels
    for lvl, (f, stride, base) in enumerate(zip(features, strides,
                                                gen.cell_anchors)):
        H, W = f.shape[-2:]
        A = base.shape[0]
        got = anchors[0][lvl]
        assert got.shape == (H * W * A, 4), got.shape
        ref = _ref_grid_anchors(base, H, W, stride, offset)
        assert jnp.allclose(got, ref, atol=1e-4, rtol=1e-5), (
            f"level {lvl} mismatch")
        # anchors are identical across images
        assert jnp.array_equal(anchors[1][lvl], got)

    # memoization: second call reuses cached arrays (no kernel relaunch)
    anchors2 = gen(features)
    assert anchors2[0][0] is anchors[0][0]

    print("KERNEL_OK")
</pallas_src>

<mosaic_0001>
module attributes {stable_mosaic.version = 11 : i64} {
  func.func @_anchor_kernel(%arg0: i32, %arg1: memref<1x384xf32, #tpu.memory_space<vmem>>, %arg2: memref<1x384xf32, #tpu.memory_space<vmem>>, %arg3: memref<16x384xf32, #tpu.memory_space<vmem>>) attributes {dimension_semantics = [#tpu.dimension_semantics<parallel>], iteration_bounds = array<i64: 1>, scalar_prefetch = 0 : i64, scratch_operands = 0 : i64, tpu.core_type = #tpu.core_type<tc>, window_params = [{pipeline_mode = #tpu.pipeline_mode<synchronous>, transform_indices = @transform_0, window_bounds = array<i64: 1, 384>}, {pipeline_mode = #tpu.pipeline_mode<synchronous>, transform_indices = @transform_1, window_bounds = array<i64: 1, 384>}, {transform_indices = @transform_2, window_bounds = array<i64: 16, 384>}]} {
    %c16_i32 = arith.constant 16 : i32
    %0 = arith.muli %arg0, %c16_i32 : i32
    %1 = tpu.iota {dimensions = array<i32: 0>} : vector<16x384xi32>
    %2 = vector.broadcast %0 : i32 to vector<16x384xi32>
    %3 = arith.addi %2, %1 : vector<16x384xi32>
    %4 = arith.sitofp %3 : vector<16x384xi32> to vector<16x384xf32>
    %c0 = arith.constant 0 : index
    %c0_0 = arith.constant 0 : index
    %5 = vector.load %arg1[%c0, %c0_0] : memref<1x384xf32, #tpu.memory_space<vmem>>, vector<1x384xf32>
    %c0_1 = arith.constant 0 : index
    %c0_2 = arith.constant 0 : index
    %6 = vector.load %arg2[%c0_1, %c0_2] : memref<1x384xf32, #tpu.memory_space<vmem>>, vector<1x384xf32>
    %7 = vector.broadcast %6 : vector<1x384xf32> to vector<16x384xf32>
    %8 = arith.mulf %4, %7 : vector<16x384xf32>
    %9 = vector.broadcast %5 : vector<1x384xf32> to vector<16x384xf32>
    %10 = arith.addf %9, %8 : vector<16x384xf32>
    %c0_3 = arith.constant 0 : index
    %c0_4 = arith.constant 0 : index
    %11 = vector.load %arg3[%c0_3, %c0_4] : memref<16x384xf32, #tpu.memory_space<vmem>>, vector<16x384xf32>
    tpu.vector_store %arg3[%c0_3, %c0_4], %10 {strides = array<i32>} : memref<16x384xf32, #tpu.memory_space<vmem>>, vector<16x384xf32>,
    return
  }
  func.func @transform_0(%arg0: i32) -> (i32, i32) {
    %c0_i32 = arith.constant 0 : i32
    %c0_i32_0 = arith.constant 0 : i32
    %c0_i32_1 = arith.constant 0 : i32
    return %c0_i32, %c0_i32_0 : i32, i32
  }
  func.func @transform_1(%arg0: i32) -> (i32, i32) {
    %c0_i32 = arith.constant 0 : i32
    %c0_i32_0 = arith.constant 0 : i32
    %c0_i32_1 = arith.constant 0 : i32
    return %c0_i32, %c0_i32_0 : i32, i32
  }
  func.func @transform_2(%arg0: i32) -> (i32, i32) {
    %c0_i32 = arith.constant 0 : i32
    %c0_i32_0 = arith.constant 0 : i32
    return %arg0, %c0_i32 : i32, i32
  }
}

</mosaic_0001>

<llo_original>
// kernel: tpu_custom_call.1
$region0: #{tpu_custom_call.1}
  #allocation0 [shape = 'u32[]', space=smem, size = 0x4, offset = 0x4, fixed_abs, tag = 'smem constant byte address 0x4 - core index']
  #allocation1 [shape = 'u32[72,128]{1,0:T(1,128)}', space=vmem, size = 0x9000, scoped, tag = 'internal scratch']
  %s0 = inlined_call_operand.hbm [shape: f32[1,384], index: 0, kind: input, shape index: {}]
  %s1 = inlined_call_operand.hbm [shape: f32[1,384], index: 1, kind: input, shape index: {}]
  %s2 = inlined_call_operand.hbm [shape: f32[16,384], index: 2, kind: output, shape index: {}]
  %s3 = sld [smem:[#allocation0]]
  $region26: #{tpu_custom_call.1} parent=0
    _
  %s5 = ssub.s32 1, %s3
  %s6 = scalar_select 0, %s5, %s3
  $region1: #{tpu_custom_call.1} parent=0
    #allocation2 [shape = 'u8[1536]{0}', space=vmem, size = 0x800, scoped, tag = 'input window, operand 0, single buffered']
    #allocation3 [shape = 's32[1]{0}', space=sflag, size = 0x4, scoped, tag = 'scoped memory for tpu_custom_call.1']
    #allocation4 [shape = 's32[1]{0}', space=sflag, size = 0x4, scoped, tag = 'scoped memory for tpu_custom_call.1']
    #allocation5 [shape = 'u8[1536]{0}', space=vmem, size = 0x800, scoped, tag = 'input window, operand 1, single buffered']
    #allocation6 [shape = 's32[1]{0}', space=sflag, size = 0x4, scoped, tag = 'scoped memory for tpu_custom_call.1']
    #allocation7 [shape = 'u8[24576]{0}', space=vmem, size = 0x6000, scoped, tag = 'output window, operand 0, single buffered']
    %7 = vsyncpa [#allocation3], 0
    %8 = vsyncpa [#allocation6], 0
    %9 = vsyncpa [#allocation4], 0
    // Predicated region
    $region2: #{tpu_custom_call.1} parent=1 // pred_check
      _
    $region3: #{tpu_custom_call.1} parent=1 // pred_check_branch
      %11 = sbr.rel (0) target = $region5
    $region4: #{tpu_custom_call.1} parent=1 // pred_region
      %13 = vsyncadd [#allocation3], 0
      %s15 = sshll.u32 %s0, 4
      %s16 = int_to_ptr.hbm [resolvable:$true] %s15
      %s17 = sshll.u32 [#allocation2], 4
      %s18 = int_to_ptr.vmem [resolvable:$true] %s17
      %20 = dma.hbm_to_vmem [thread:$0]  %s16, 48, %s18, [#allocation3]
    $region5: #{tpu_custom_call.1} parent=1 // pred_fallthru
      _
    // Predicated region
    $region6: #{tpu_custom_call.1} parent=1 // pred_check
      _
    $region7: #{tpu_custom_call.1} parent=1 // pred_check_branch
      %22 = sbr.rel (0) target = $region9
    $region8: #{tpu_custom_call.1} parent=1 // pred_region
      %24 = vsyncadd [#allocation6], 0
      %s26 = sshll.u32 %s1, 4
      %s27 = int_to_ptr.hbm [resolvable:$true] %s26
      %s28 = sshll.u32 [#allocation5], 4
      %s29 = int_to_ptr.vmem [resolvable:$true] %s28
      %31 = dma.hbm_to_vmem [thread:$0]  %s27, 48, %s29, [#allocation6]
    $region9: #{tpu_custom_call.1} parent=1 // pred_fallthru
      _
    // Predicated region
    $region10: #{tpu_custom_call.1} parent=1 // pred_check
      _
    $region11: #{tpu_custom_call.1} parent=1 // pred_check_branch
      %33 = sbr.rel (0) target = $region13
    $region12: #{tpu_custom_call.1} parent=1 // pred_region
      %35 = dma.done [#allocation3], 48
    $region13: #{tpu_custom_call.1} parent=1 // pred_fallthru
      _
    // Predicated region
    $region14: #{tpu_custom_call.1} parent=1 // pred_check
      _
    $region15: #{tpu_custom_call.1} parent=1 // pred_check_branch
      %37 = sbr.rel (0) target = $region17
    $region16: #{tpu_custom_call.1} parent=1 // pred_region
      %39 = dma.done [#allocation6], 48
    $region17: #{tpu_custom_call.1} parent=1 // pred_fallthru
      _
    %s40 = smul.u32 0, 16
    %v41 = vlaneseq
    %v42 = vshrl.u32 %v41, 7
    %v43 = vadd.s32 %v42, 8
    %v44 = vstv %s40
    %v45 = vadd.s32 %v44, %v42
    %v46 = vadd.s32 %v44, %v43
    %v47 = vcvt.s32.f32 %v45
    %v48 = vcvt.s32.f32 %v46
    %v49 = vld [vmem:[#allocation2] sm:$0x7]
    %v50 = vld [vmem:[#allocation5] sm:$0x7]
    %v52 = vperm.slane %v50, 0
    %v53 = vperm.slane %v50, 1
    %v54 = vperm.slane %v50, 2
    %v58 = vmul.f32 %v47, %v52
    %v59 = vmul.f32 %v47, %v53
    %v60 = vmul.f32 %v47, %v54
    %v61 = vmul.f32 %v48, %v52
    %v62 = vmul.f32 %v48, %v53
    %v63 = vmul.f32 %v48, %v54
    %v65 = vperm.slane %v49, 0
    %v66 = vperm.slane %v49, 1
    %v67 = vperm.slane %v49, 2
    %v71 = vadd.f32 %v65, %v58
    %v72 = vadd.f32 %v66, %v59
    %v73 = vadd.f32 %v67, %v60
    %v74 = vadd.f32 %v65, %v61
    %v75 = vadd.f32 %v66, %v62
    %v76 = vadd.f32 %v67, %v63
    %77 = vst [vmem:[#allocation7] sm:$0xff] %v71
    %78 = vst [vmem:[#allocation7 + $0x8] sm:$0xff] %v72
    %79 = vst [vmem:[#allocation7 + $0x10] sm:$0xff] %v73
    %80 = vst [vmem:[#allocation7 + $0x18] sm:$0xff] %v74
    %81 = vst [vmem:[#allocation7 + $0x20] sm:$0xff] %v75
    %82 = vst [vmem:[#allocation7 + $0x28] sm:$0xff] %v76
    // Predicated region
    $region18: #{tpu_custom_call.1} parent=1 // pred_check
      _
    $region19: #{tpu_custom_call.1} parent=1 // pred_check_branch
      %84 = sbr.rel (0) target = $region21
    $region20: #{tpu_custom_call.1} parent=1 // pred_region
      %86 = vsyncadd [#allocation4], 0
      %s87 = sshll.u32 [#allocation7], 4
      %s88 = int_to_ptr.vmem [resolvable:$true] %s87
      %s89 = sshll.u32 %s2, 4
      %s90 = int_to_ptr.hbm [resolvable:$true] %s89
      %95 = dma.vmem_to_hbm [thread:$0]  %s88, 768, %s90, [#allocation4], 384, 384, 24
    $region21: #{tpu_custom_call.1} parent=1 // pred_fallthru
      _
    // Predicated region
    $region22: #{tpu_custom_call.1} parent=1 // pred_check
      _
    $region23: #{tpu_custom_call.1} parent=1 // pred_check_branch
      %97 = sbr.rel (0) target = $region25
    $region24: #{tpu_custom_call.1} parent=1 // pred_region
      %99 = dma.done [#allocation4], 768
    $region25: #{tpu_custom_call.1} parent=1 // pred_fallthru
      _
    %100 = vsyncpa [#allocation3], 1
    %101 = vsyncpa [#allocation6], 1
    %102 = vsyncpa [#allocation4], 1

</llo_original>
